<compile_context>
chip_gen: v7x
topology: tpu7x:2x2x1
jax: 0.10.0
libtpu: 0.0.40
codegen_flags: <defaults>
</compile_context>

<pallas_src>
import jax
import jax.numpy as jnp
from jax.experimental import pallas as pl
from jax.experimental.pallas import tpu as pltpu


# ---------------------------------------------------------------------------
# Kernel body: two overlapped HBM->HBM DMAs, one per embedding table.
# ---------------------------------------------------------------------------
def _identity_dma_kernel(u_hbm, i_hbm, u_out, i_out, u_sem, i_sem):
    cu = pltpu.make_async_copy(u_hbm, u_out, u_sem)
    ci = pltpu.make_async_copy(i_hbm, i_out, i_sem)
    cu.start()
    ci.start()
    cu.wait()
    ci.wait()


def _materialize_tables(user_emb, item_emb):
    """Single-launch on-device materialization of both tables (HBM->HBM DMA)."""
    nbytes = (user_emb.size * user_emb.dtype.itemsize
              + item_emb.size * item_emb.dtype.itemsize)
    return pl.pallas_call(
        _identity_dma_kernel,
        out_shape=(
            jax.ShapeDtypeStruct(user_emb.shape, user_emb.dtype),
            jax.ShapeDtypeStruct(item_emb.shape, item_emb.dtype),
        ),
        in_specs=[
            pl.BlockSpec(memory_space=pl.ANY),   # raw HBM ref, no auto-DMA
            pl.BlockSpec(memory_space=pl.ANY),
        ],
        out_specs=(
            pl.BlockSpec(memory_space=pl.ANY),
            pl.BlockSpec(memory_space=pl.ANY),
        ),
        scratch_shapes=[
            pltpu.SemaphoreType.DMA(()),
            pltpu.SemaphoreType.DMA(()),
        ],
        cost_estimate=pl.CostEstimate(
            flops=0, transcendentals=0, bytes_accessed=2 * nbytes
        ),
    )(user_emb, item_emb)


def matrix_factorization_forward(user_emb, item_emb, *, materialize=False):
    """Forward pass of Matrix_Factorization: returns (user_emb, item_emb).

    Default is zero-copy (the forward is an identity, so no kernel should
    run).  Set materialize=True to force an explicit on-device Pallas copy
    (single launch, two overlapped HBM->HBM DMAs).
    """
    if not materialize:
        return user_emb, item_emb
    return _materialize_tables(user_emb, item_emb)


# ---------------------------------------------------------------------------
# Deterministic parameter init (xavier_uniform, matching nn.init.xavier_uniform_)
# ---------------------------------------------------------------------------
def xavier_uniform(key, shape, dtype=jnp.float32):
    fan_out, fan_in = shape[0], shape[1]  # torch: fan_in = cols, fan_out = rows
    bound = (6.0 / (fan_in + fan_out)) ** 0.5
    return jax.random.uniform(key, shape, dtype=dtype, minval=-bound, maxval=bound)


if __name__ == "__main__":
    # Small synthetic "data" sizes: user_num=32, item_num=48, emb_size=16
    user_num, item_num, emb_size = 32, 48, 16

    key = jax.random.PRNGKey(0)
    k_user, k_item = jax.random.split(key)
    user_emb = xavier_uniform(k_user, (user_num, emb_size))
    item_emb = xavier_uniform(k_item, (item_num, emb_size))

    # Zero-copy path (the real implementation of forward()).
    u_zero, i_zero = matrix_factorization_forward(user_emb, item_emb)
    assert u_zero is user_emb and i_zero is item_emb

    # Explicit on-device materialization via the Pallas kernel (one launch).
    u_out, i_out = matrix_factorization_forward(
        user_emb, item_emb, materialize=True
    )
    jax.block_until_ready((u_out, i_out))

    # forward() is an identity on the parameters — verify bit-exact pass-through.
    assert u_out.shape == (user_num, emb_size)
    assert i_out.shape == (item_num, emb_size)
    assert bool(jnp.all(u_out == user_emb))
    assert bool(jnp.all(i_out == item_emb))

    print("KERNEL_OK")
</pallas_src>

<mosaic_0001>
module attributes {stable_mosaic.version = 11 : i64} {
  func.func @_identity_dma_kernel(%arg0: memref<32x16xf32, #tpu.memory_space<any>>, %arg1: memref<48x16xf32, #tpu.memory_space<any>>, %arg2: memref<32x16xf32, #tpu.memory_space<any>>, %arg3: memref<48x16xf32, #tpu.memory_space<any>>, %arg4: memref<!tpu.dma_semaphore, #tpu.memory_space<semaphore_mem>>, %arg5: memref<!tpu.dma_semaphore, #tpu.memory_space<semaphore_mem>>) attributes {dimension_semantics = [], scalar_prefetch = 0 : i64, scratch_operands = 2 : i64, tpu.core_type = #tpu.core_type<tc>} {
    tpu.enqueue_dma source(%arg0 : memref<32x16xf32, #tpu.memory_space<any>>) target(%arg2 : memref<32x16xf32, #tpu.memory_space<any>>) target_semaphore(%arg4 : memref<!tpu.dma_semaphore, #tpu.memory_space<semaphore_mem>>)
    tpu.enqueue_dma source(%arg1 : memref<48x16xf32, #tpu.memory_space<any>>) target(%arg3 : memref<48x16xf32, #tpu.memory_space<any>>) target_semaphore(%arg5 : memref<!tpu.dma_semaphore, #tpu.memory_space<semaphore_mem>>)
    tpu.wait_dma2 semaphore(%arg4 : memref<!tpu.dma_semaphore, #tpu.memory_space<semaphore_mem>>) src(%arg0 : memref<32x16xf32, #tpu.memory_space<any>>) dst(%arg2 : memref<32x16xf32, #tpu.memory_space<any>>)
    tpu.wait_dma2 semaphore(%arg5 : memref<!tpu.dma_semaphore, #tpu.memory_space<semaphore_mem>>) src(%arg1 : memref<48x16xf32, #tpu.memory_space<any>>) dst(%arg3 : memref<48x16xf32, #tpu.memory_space<any>>)
    return
  }
}

</mosaic_0001>

<llo_original>
// kernel: tpu_custom_call.1
$region0: #{tpu_custom_call.1}
  #allocation0 [shape = 'u32[]', space=smem, size = 0x4, offset = 0x4, fixed_abs, tag = 'smem constant byte address 0x4 - core index']
  #allocation1 [shape = 'u32[144,128]{1,0:T(1,128)}', space=vmem, size = 0x12000, scoped, tag = 'internal scratch']
  #allocation2 [shape = 's32[1]{0}', space=sflag, size = 0x4, scoped, tag = 'scratch operand']
  #allocation3 [shape = 's32[1]{0}', space=sflag, size = 0x4, scoped, tag = 'scratch operand']
  #allocation4 [shape = 's32[]', space=sflag, size = 0x4, offset = 0, fixed_abs, tag = 'sflag constant byte address 0x0 - dummy sync flag']
  #allocation5 [shape = 's32[]', space=sflag, size = 0x4, offset = 0, fixed_abs, tag = 'sflag constant byte address 0x0 - dummy sync flag']
  %s0 = inlined_call_operand.vmem [shape: f32[32,16], index: 0, kind: input, shape index: {}]
  %s1 = inlined_call_operand.vmem [shape: f32[48,16], index: 1, kind: input, shape index: {}]
  %s2 = inlined_call_operand.vmem [shape: f32[32,16], index: 2, kind: output, shape index: {0}]
  %s3 = inlined_call_operand.vmem [shape: f32[48,16], index: 3, kind: output, shape index: {1}]
  %4 = xla_tuple %s2, %s3
  %s5 = sld [smem:[#allocation0]]
  $region70: #{tpu_custom_call.1} parent=0
    _
  %s7 = ssub.s32 1, %s5
  %s8 = scalar_select 0, %s7, %s5
  %p10 = scmp.lt.u32.totalorder 32, 8
  %p11 = pneg %p10
  // Predicated region
  $region2: #{tpu_custom_call.1} parent=0 // pred_check
    _
  $region3: #{tpu_custom_call.1} parent=0 // pred_check_branch
    %13 = sbr.rel (%p10) target = $region5
  $region4: #{tpu_custom_call.1} parent=0 // pred_region
    %s28 = sand.u32 32, 7
    %p29 = scmp.eq.s32.totalorder %s28, 0
    // Predicated region
    $region17: #{tpu_custom_call.1} parent=4 // pred_check
      %p30 = pneg %p29
    $region18: #{tpu_custom_call.1} parent=4 // pred_check_branch
      %32 = sbr.rel (%p30) target = $region20
    $region19: #{tpu_custom_call.1} parent=4 // pred_region
      loop: start=0, step=1, limit=1
      $region21: #{tpu_custom_call.1} parent=19 // loop_pre_header
        _
      $region22: #{tpu_custom_call.1} parent=19 // loop_header
        %s34 = sphi 0, %s38
        %p35 = scmp.ge.s32.totalorder %s34, 1
        %s39 = sphi %s0, %s0
        %s40 = sphi %s2, %s2
      $region23: #{tpu_custom_call.1} parent=19 // loop_header_branch
        %37 = sbr.rel (%p35) target = $region27
      $region24: #{tpu_custom_call.1} parent=19 // loop_body
        %v41 = vld [vmem:[%s39] sm:$0xff]
        %42 = vst [vmem:[%s40] sm:$0xff] %v41
        %v43 = vld [vmem:[%s39 + $0x8] sm:$0xff]
        %44 = vst [vmem:[%s40 + $0x8] sm:$0xff] %v43
        %v45 = vld [vmem:[%s39 + $0x10] sm:$0xff]
        %46 = vst [vmem:[%s40 + $0x10] sm:$0xff] %v45
        %v47 = vld [vmem:[%s39 + $0x18] sm:$0xff]
        %48 = vst [vmem:[%s40 + $0x18] sm:$0xff] %v47
      $region25: #{tpu_custom_call.1} parent=19 // loop_footer
        %s38 = sadd.s32 1, %s34
      $region26: #{tpu_custom_call.1} parent=19 // loop_footer_branch
        %33 = sbr.rel target = $region22
      $region27: #{tpu_custom_call.1} parent=19 // loop_exit
        _
    $region20: #{tpu_custom_call.1} parent=4 // pred_fallthru
      _
    %p49 = pneg %p29
    // Predicated region
    $region28: #{tpu_custom_call.1} parent=4 // pred_check
      _
    $region29: #{tpu_custom_call.1} parent=4 // pred_check_branch
      %51 = sbr.rel (%p29) target = $region31
    $region30: #{tpu_custom_call.1} parent=4 // pred_region
      %s52 = sand.u32 32, 7
    $region31: #{tpu_custom_call.1} parent=4 // pred_fallthru
      _
  $region5: #{tpu_custom_call.1} parent=0 // pred_fallthru
    _
  // Predicated region
  $region6: #{tpu_custom_call.1} parent=0 // pred_check
    %p14 = pneg %p10
  $region7: #{tpu_custom_call.1} parent=0 // pred_check_branch
    %16 = sbr.rel (%p14) target = $region9
  $region8: #{tpu_custom_call.1} parent=0 // pred_region
    %s17 = sshllo.u32 0, 32
    loop: start=0, step=1, limit=1
    $region10: #{tpu_custom_call.1} parent=8 // loop_pre_header
      _
    $region11: #{tpu_custom_call.1} parent=8 // loop_header
      %s19 = sphi 0, %s23
      %p20 = scmp.ge.s32.totalorder %s19, 1
      %s24 = sphi %s0, %s0
      %s25 = sphi %s2, %s2
    $region12: #{tpu_custom_call.1} parent=8 // loop_header_branch
      %22 = sbr.rel (%p20) target = $region16
    $region13: #{tpu_custom_call.1} parent=8 // loop_body
      %v26 = vld [vmem:[%s24] sm:%s17]
      %27 = vst [vmem:[%s25] sm:%s17] %v26
    $region14: #{tpu_custom_call.1} parent=8 // loop_footer
      %s23 = sadd.s32 1, %s19
    $region15: #{tpu_custom_call.1} parent=8 // loop_footer_branch
      %18 = sbr.rel target = $region11
    $region16: #{tpu_custom_call.1} parent=8 // loop_exit
      _
  $region9: #{tpu_custom_call.1} parent=0 // pred_fallthru
    _
  // Predicated region
  $region32: #{tpu_custom_call.1} parent=0 // pred_check
    _
  $region33: #{tpu_custom_call.1} parent=0 // pred_check_branch
    %55 = sbr.rel (0) target = $region35
  $region34: #{tpu_custom_call.1} parent=0 // pred_region
    %56 = vsyncadd [#allocation2], 512
  $region35: #{tpu_custom_call.1} parent=0 // pred_fallthru
    _
  %p58 = scmp.lt.u32.totalorder 48, 8
  %p59 = pneg %p58
  // Predicated region
  $region36: #{tpu_custom_call.1} parent=0 // pred_check
    _
  $region37: #{tpu_custom_call.1} parent=0 // pred_check_branch
    %61 = sbr.rel (%p58) target = $region39
  $region38: #{tpu_custom_call.1} parent=0 // pred_region
    %s76 = sand.u32 48, 7
    %p77 = scmp.eq.s32.totalorder %s76, 0
    // Predicated region
    $region51: #{tpu_custom_call.1} parent=38 // pred_check
      %p78 = pneg %p77
    $region52: #{tpu_custom_call.1} parent=38 // pred_check_branch
      %80 = sbr.rel (%p78) target = $region54
    $region53: #{tpu_custom_call.1} parent=38 // pred_region
      loop: start=0, step=1, limit=1
      $region55: #{tpu_custom_call.1} parent=53 // loop_pre_header
        _
      $region56: #{tpu_custom_call.1} parent=53 // loop_header
        %s82 = sphi 0, %s86
        %p83 = scmp.ge.s32.totalorder %s82, 1
        %s87 = sphi %s1, %s1
        %s88 = sphi %s3, %s3
      $region57: #{tpu_custom_call.1} parent=53 // loop_header_branch
        %85 = sbr.rel (%p83) target = $region61
      $region58: #{tpu_custom_call.1} parent=53 // loop_body
        %v89 = vld [vmem:[%s87] sm:$0xff]
        %90 = vst [vmem:[%s88] sm:$0xff] %v89
        %v91 = vld [vmem:[%s87 + $0x8] sm:$0xff]
        %92 = vst [vmem:[%s88 + $0x8] sm:$0xff] %v91
        %v93 = vld [vmem:[%s87 + $0x10] sm:$0xff]
        %94 = vst [vmem:[%s88 + $0x10] sm:$0xff] %v93
        %v95 = vld [vmem:[%s87 + $0x18] sm:$0xff]
        %96 = vst [vmem:[%s88 + $0x18] sm:$0xff] %v95
        %v97 = vld [vmem:[%s87 + $0x20] sm:$0xff]
        %98 = vst [vmem:[%s88 + $0x20] sm:$0xff] %v97
        %v99 = vld [vmem:[%s87 + $0x28] sm:$0xff]
        %100 = vst [vmem:[%s88 + $0x28] sm:$0xff] %v99
      $region59: #{tpu_custom_call.1} parent=53 // loop_footer
        %s86 = sadd.s32 1, %s82
      $region60: #{tpu_custom_call.1} parent=53 // loop_footer_branch
        %81 = sbr.rel target = $region56
      $region61: #{tpu_custom_call.1} parent=53 // loop_exit
        _
    $region54: #{tpu_custom_call.1} parent=38 // pred_fallthru
      _
    %p101 = pneg %p77
    // Predicated region
    $region62: #{tpu_custom_call.1} parent=38 // pred_check
      _
    $region63: #{tpu_custom_call.1} parent=38 // pred_check_branch
      %103 = sbr.rel (%p77) target = $region65
    $region64: #{tpu_custom_call.1} parent=38 // pred_region
      %s104 = sand.u32 48, 7
    $region65: #{tpu_custom_call.1} parent=38 // pred_fallthru
      _
  $region39: #{tpu_custom_call.1} parent=0 // pred_fallthru
    _
  // Predicated region
  $region40: #{tpu_custom_call.1} parent=0 // pred_check
    %p62 = pneg %p58
  $region41: #{tpu_custom_call.1} parent=0 // pred_check_branch
    %64 = sbr.rel (%p62) target = $region43
  $region42: #{tpu_custom_call.1} parent=0 // pred_region
    %s65 = sshllo.u32 0, 48
    loop: start=0, step=1, limit=1
    $region44: #{tpu_custom_call.1} parent=42 // loop_pre_header
      _
    $region45: #{tpu_custom_call.1} parent=42 // loop_header
      %s67 = sphi 0, %s71
      %p68 = scmp.ge.s32.totalorder %s67, 1
      %s72 = sphi %s1, %s1
      %s73 = sphi %s3, %s3
    $region46: #{tpu_custom_call.1} parent=42 // loop_header_branch
      %70 = sbr.rel (%p68) target = $region50
    $region47: #{tpu_custom_call.1} parent=42 // loop_body
      %v74 = vld [vmem:[%s72] sm:%s65]
      %75 = vst [vmem:[%s73] sm:%s65] %v74
    $region48: #{tpu_custom_call.1} parent=42 // loop_footer
      %s71 = sadd.s32 1, %s67
    $region49: #{tpu_custom_call.1} parent=42 // loop_footer_branch
      %66 = sbr.rel target = $region45
    $region50: #{tpu_custom_call.1} parent=42 // loop_exit
      _
  $region43: #{tpu_custom_call.1} parent=0 // pred_fallthru
    _
  // Predicated region
  $region66: #{tpu_custom_call.1} parent=0 // pred_check
    _
  $region67: #{tpu_custom_call.1} parent=0 // pred_check_branch
    %107 = sbr.rel (0) target = $region69
  $region68: #{tpu_custom_call.1} parent=0 // pred_region
    %108 = vsyncadd [#allocation3], 768
  $region69: #{tpu_custom_call.1} parent=0 // pred_fallthru
    _
  %s109 = smul.u32 32, 1
  %s110 = sshll.u32 %s109, 4
  %111 = dma.done [#allocation2], %s110
  %s112 = smul.u32 48, 1
  %s113 = sshll.u32 %s112, 4
  %114 = dma.done [#allocation3], %s113
  %115 = vsyncmov [#allocation2]
  %s116 = vpop.sfrf %115
  %p117 = scmp.eq.s32.totalorder %s116, 0
  %p118 = pneg %p117
  %120 = shalt.err (%p118)
  %121 = vsyncmov [#allocation3]
  %s122 = vpop.sfrf %121
  %p123 = scmp.eq.s32.totalorder %s122, 0
  %p124 = pneg %p123
  %126 = shalt.err (%p124)

</llo_original>
